<compile_context>
chip_gen: v6e
topology: v6e:2x2x1
jax: 0.10.0
libtpu: 0.0.40
codegen_flags: <defaults>
</compile_context>

<pallas_src>
import functools

import jax
import jax.numpy as jnp
import numpy as np
from jax.experimental import pallas as pl
from jax.experimental.pallas import tpu as pltpu


def _round_up(x, m):
    return ((x + m - 1) // m) * m


def _mxu_dims():
    """(lane width, K depth) of the MXU for pack/K sizing.  Conservative fallback = 128."""
    try:
        kind = jax.devices()[0].device_kind.lower()
    except Exception:
        return 128, 128
    if any(tag in kind for tag in ("v6", "v7", "7x")):
        return 256, 256          # v6e / v7x: 256x256 MXU
    return 128, 128              # v5e and older: 128-wide / 128-deep


def _featurize_kernel(in_ref, sel_ref, b4_ref, out_ref, *, kp, max_z):
    # in_ref  : (Tg, 2*P)     bf16  interleaved [an_0, chg_0, an_1, chg_1, ...]
    # sel_ref : (2*P, P*Kp)   bf16  fused routing matrix (an -> non-charge lanes of its
    #                               group, chg -> the k==max_z lane of its group)
    # b4_ref  : (P*Kp, P*F)   f32   block-diagonal folded table (emb@W^T + bias, w_chg row)
    # out_ref : (Tg, P*F)     f32   lane-dense output, P atoms packed per row
    #
    # Single fused K=2P bf16 broadcast dot (exact: inputs are small integers).
    fused = jnp.dot(in_ref[...], sel_ref[...],
                    preferred_element_type=jnp.float32)                 # (Tg, P*Kp)

    # Within-group lane index pattern, generated in-registers (no constant input DMA).
    col = jax.lax.broadcasted_iota(jnp.int32, (1, fused.shape[1]), 1)
    k_in_group = col % kp                                                # (1, P*Kp)

    onehot = (fused == k_in_group.astype(jnp.float32)).astype(jnp.float32)
    # The k==max_z lane of each group carries the appended per-molecule charge.
    x = jnp.where(k_in_group == max_z, fused, onehot)                    # (Tg, P*Kp)

    # Main MXU matmul: selects EW[z] (+bias) per atom and adds charge * w_chg, emitting
    # P atoms side-by-side in a full MXU-width output row.  Kept f32 for accuracy.
    out_ref[...] = jnp.dot(x, b4_ref[...], preferred_element_type=jnp.float32)


def featurize_input(atomic_numbers, atomic_subsystem_indices, total_charge,
                    emb_weight, mix_weight, mix_bias, *,
                    tile_rows=1024, target_steps=4):
    """Pallas-backed FeaturizeInput forward.

    atomic_numbers           : (N,)  int32   (values in [0, max_z))
    atomic_subsystem_indices : (N,)  int32   (sorted, contiguous molecule ids)
    total_charge             : (M,)  f32     per-molecule total charge (small integers)
    emb_weight               : (max_z, F) f32
    mix_weight               : (F, F+1)   f32  (PyTorch nn.Linear layout: out, in)
    mix_bias                 : (F,)       f32
    returns                  : (N, F) f32
    """
    n = int(atomic_numbers.shape[0])
    max_z, feat = emb_weight.shape

    emb_weight = emb_weight.astype(jnp.float32)
    mix_weight = mix_weight.astype(jnp.float32)
    mix_bias = mix_bias.astype(jnp.float32)

    # TODO(synk): torch.unique(return_counts) + repeat_interleave is realized as an XLA
    # gather here (valid for sorted, contiguous molecule ids); folding it into the kernel
    # via scalar-prefetched molecule offsets would only save ~4 B/atom of HBM traffic.
    per_atom_charge = total_charge.astype(jnp.float32)[atomic_subsystem_indices]

    # Fold embedding + Dense: onehot(z) @ (E @ W_emb.T + bias) == E[z] @ W_emb.T + bias.
    w_emb = mix_weight[:, :feat]                      # (F, F)
    w_chg = mix_weight[:, feat]                       # (F,)
    ew = emb_weight @ w_emb.T + mix_bias[None, :]     # (max_z, F), bias folded in

    # --- pack / K sizing matched to the MXU of the current chip ----------------------
    lanes, depth = _mxu_dims()
    if feat <= lanes and lanes % feat == 0:
        pack = lanes // feat
    else:
        pack = 1

    def _kp_for(p):
        # Keep the packed lane width (P*Kp) a multiple of 128 when possible.
        return _round_up(max_z + 1, max(8, 128 // p))

    # Guard the block-diagonal K against the MXU depth (128 v5e / 256 v6e,v7x): the
    # block-diagonal layout pays pack-times redundant K tiles once P*Kp exceeds it.
    while pack > 1 and pack * _kp_for(pack) > depth:
        pack //= 2
    kp = _kp_for(pack)

    # --- trace-time constants ----------------------------------------------------------
    # Per-group folded table: rows [0, max_z) -> EW(+bias), row max_z -> w_chg, rest 0.
    b = jnp.zeros((kp, feat), jnp.float32).at[:max_z].set(ew).at[max_z].set(w_chg)
    # Block-diagonal (P*Kp, P*F): one matmul emits P atoms side-by-side in lanes.
    b4 = jnp.kron(jnp.eye(pack, dtype=jnp.float32), b)

    # Fused routing matrix: row 2j routes atom j's atomic number to all non-charge lanes
    # of its group, row 2j+1 routes its charge to the k==max_z lane.
    c = np.arange(pack * kp)
    grp, kk = c // kp, c % kp
    sel_np = np.zeros((2 * pack, pack * kp), np.float32)
    sel_np[2 * grp, c] = (kk != max_z).astype(np.float32)
    sel_np[2 * grp + 1, c] = (kk == max_z).astype(np.float32)
    sel = jnp.asarray(sel_np, dtype=jnp.bfloat16)

    # --- pack P atoms per row; interleave (an, chg) so one K=2P dot broadcasts both ----
    groups = -(-n // pack)
    pad = groups * pack - n
    an_f = atomic_numbers.astype(jnp.float32)
    chg_f = per_atom_charge
    if pad:
        an_f = jnp.pad(an_f, (0, pad))
        chg_f = jnp.pad(chg_f, (0, pad))
    # bf16 is exact for atomic numbers (< 256) and integer molecular charges.
    inter = jnp.stack([an_f, chg_f], axis=-1).reshape(groups, 2 * pack).astype(jnp.bfloat16)

    # --- tiling: VMEM-safe tiles, and >= target_steps grid steps for large inputs ------
    tile_g = max(8, min(int(tile_rows), _round_up(-(-groups // target_steps), 8)))
    grid = (-(-groups // tile_g),)

    kernel = functools.partial(_featurize_kernel, kp=kp, max_z=max_z)
    out = pl.pallas_call(
        kernel,
        out_shape=jax.ShapeDtypeStruct((groups, pack * feat), jnp.float32),
        grid_spec=pltpu.PrefetchScalarGridSpec(
            num_scalar_prefetch=0,
            grid=grid,
            in_specs=[
                pl.BlockSpec((tile_g, 2 * pack), lambda i: (i, 0)),        # interleaved an/chg
                pl.BlockSpec((2 * pack, pack * kp), lambda i: (0, 0)),     # routing matrix
                pl.BlockSpec((pack * kp, pack * feat), lambda i: (0, 0)),  # folded table
            ],
            out_specs=pl.BlockSpec((tile_g, pack * feat), lambda i: (i, 0)),
        ),
        compiler_params=pltpu.CompilerParams(
            dimension_semantics=("parallel",)),
    )(inter, sel, b4)

    # (groups, P*F) is row-major identical to (groups*P, F): reshape is free, and the
    # [:n] slice is a no-op whenever N is a multiple of the pack factor.
    return out.reshape(groups * pack, feat)[:n]


def _reference(atomic_numbers, atomic_subsystem_indices, total_charge,
               emb_weight, mix_weight, mix_bias):
    emb = emb_weight[atomic_numbers]                                  # (N, F)
    chg = total_charge[atomic_subsystem_indices][:, None]             # (N, 1)
    x = jnp.concatenate([emb, chg], axis=1)                           # (N, F+1)
    return x @ mix_weight.T + mix_bias                                # (N, F)


if __name__ == "__main__":
    key = jax.random.PRNGKey(0)
    k1, k2, k3 = jax.random.split(key, 3)

    # Small synthetic system: 2 molecules with 5 and 7 atoms -> 12 atoms total.
    max_atomic_number = 20          # featurization_config["maximum_atomic_number"]
    num_features = 32               # featurization_config["number_of_per_atom_features"]
    counts = np.array([5, 7], dtype=np.int32)
    n_atoms = int(counts.sum())

    atomic_numbers = jax.random.randint(k1, (n_atoms,), 1, max_atomic_number,
                                        dtype=jnp.int32)
    atomic_subsystem_indices = jnp.asarray(np.repeat(np.arange(2, dtype=np.int32),
                                                     counts))
    total_charge = jnp.array([0.0, -1.0], dtype=jnp.float32)

    # Deterministic parameter init mimicking the module's __init__:
    #   nn.Embedding -> N(0, 1);  DenseWithCustomDist -> xavier_uniform weight, zero bias.
    emb_weight = jax.random.normal(k2, (max_atomic_number, num_features),
                                   dtype=jnp.float32)
    fan_in, fan_out = num_features + 1, num_features
    limit = float(np.sqrt(6.0 / (fan_in + fan_out)))
    mix_weight = jax.random.uniform(k3, (num_features, num_features + 1),
                                    minval=-limit, maxval=limit,
                                    dtype=jnp.float32)
    mix_bias = jnp.zeros((num_features,), dtype=jnp.float32)

    out = featurize_input(atomic_numbers, atomic_subsystem_indices, total_charge,
                          emb_weight, mix_weight, mix_bias)
    out = jax.block_until_ready(out)

    ref = _reference(atomic_numbers, atomic_subsystem_indices, total_charge,
                     emb_weight, mix_weight, mix_bias)
    assert out.shape == (n_atoms, num_features)
    np.testing.assert_allclose(np.asarray(out), np.asarray(ref),
                               rtol=1e-5, atol=1e-5)
    print("KERNEL_OK")
</pallas_src>

<mosaic_0001>
module attributes {stable_mosaic.version = 11 : i64} {
  func.func @_featurize_kernel(%arg0: i32, %arg1: memref<8x8xbf16, #tpu.memory_space<vmem>>, %arg2: memref<8x128xbf16, #tpu.memory_space<vmem>>, %arg3: memref<128x128xf32, #tpu.memory_space<vmem>>, %arg4: memref<8x128xf32, #tpu.memory_space<vmem>>) attributes {dimension_semantics = [#tpu.dimension_semantics<parallel>], iteration_bounds = array<i64: 1>, scalar_prefetch = 0 : i64, scratch_operands = 0 : i64, tpu.core_type = #tpu.core_type<tc>, window_params = [{transform_indices = @transform_0, window_bounds = array<i64: 8, 8>}, {pipeline_mode = #tpu.pipeline_mode<synchronous>, transform_indices = @transform_1, window_bounds = array<i64: 8, 128>}, {pipeline_mode = #tpu.pipeline_mode<synchronous>, transform_indices = @transform_2, window_bounds = array<i64: 128, 128>}, {transform_indices = @transform_3, window_bounds = array<i64: 8, 128>}]} {
    %c0 = arith.constant 0 : index
    %c0_0 = arith.constant 0 : index
    %0 = vector.load %arg1[%c0, %c0_0] : memref<8x8xbf16, #tpu.memory_space<vmem>>, vector<8x8xbf16>
    %c0_1 = arith.constant 0 : index
    %c0_2 = arith.constant 0 : index
    %1 = vector.load %arg2[%c0_1, %c0_2] : memref<8x128xbf16, #tpu.memory_space<vmem>>, vector<8x128xbf16>
    %cst = arith.constant dense<0.000000e+00> : vector<8x128xf32>
    %2 = tpu.matmul %0, %1, %cst {dimension_numbers = #tpu.dot_dimension_numbers<[1], [0], [0], [1], [0, 0, 1, 1], [], []>} : vector<8x8xbf16>, vector<8x128xbf16>, vector<8x128xf32> -> vector<8x128xf32>
    %3 = tpu.iota {dimensions = array<i32: 1>} : vector<1x128xi32>
    %c32_i32 = arith.constant 32 : i32
    %c0_i32 = arith.constant 0 : i32
    %4 = arith.cmpi eq, %c32_i32, %c0_i32 : i32
    %c1_i32 = arith.constant 1 : i32
    %5 = arith.select %4, %c1_i32, %c32_i32 : i32
    %6 = vector.broadcast %5 : i32 to vector<1x128xi32>
    %7 = arith.remsi %3, %6 : vector<1x128xi32>
    %c0_i32_3 = arith.constant 0 : i32
    %8 = vector.broadcast %c0_i32_3 : i32 to vector<1x128xi32>
    %9 = arith.cmpi ne, %7, %8 : vector<1x128xi32>
    %c0_i32_4 = arith.constant 0 : i32
    %10 = vector.broadcast %c0_i32_4 : i32 to vector<1x128xi32>
    %11 = arith.cmpi slt, %7, %10 : vector<1x128xi32>
    %c0_i32_5 = arith.constant 0 : i32
    %12 = arith.cmpi slt, %5, %c0_i32_5 : i32
    %13 = vector.broadcast %12 : i1 to vector<1x128xi1>
    %14 = vector.broadcast %13 : vector<1x128xi1> to vector<1x128xi1>
    %15 = arith.xori %11, %14 : vector<1x128xi1>
    %16 = arith.andi %15, %9 : vector<1x128xi1>
    %17 = vector.broadcast %5 : i32 to vector<1x128xi32>
    %18 = arith.addi %7, %17 : vector<1x128xi32>
    %19 = arith.select %16, %18, %7 : vector<1x128xi1>, vector<1x128xi32>
    %20 = arith.sitofp %19 : vector<1x128xi32> to vector<1x128xf32>
    %21 = vector.broadcast %20 : vector<1x128xf32> to vector<8x128xf32>
    %22 = arith.cmpf oeq, %2, %21 : vector<8x128xf32>
    %23 = arith.extui %22 : vector<8x128xi1> to vector<8x128xi32>
    %24 = arith.sitofp %23 : vector<8x128xi32> to vector<8x128xf32>
    %c20_i32 = arith.constant 20 : i32
    %25 = vector.broadcast %c20_i32 : i32 to vector<1x128xi32>
    %26 = arith.cmpi eq, %19, %25 : vector<1x128xi32>
    %27 = vector.shape_cast %26 : vector<1x128xi1> to vector<1x128xi1>
    %28 = vector.broadcast %27 : vector<1x128xi1> to vector<8x128xi1>
    %29 = arith.select %28, %2, %24 : vector<8x128xi1>, vector<8x128xf32>
    %c0_6 = arith.constant 0 : index
    %c0_7 = arith.constant 0 : index
    %30 = vector.load %arg3[%c0_6, %c0_7] : memref<128x128xf32, #tpu.memory_space<vmem>>, vector<128x128xf32>
    %cst_8 = arith.constant dense<0.000000e+00> : vector<8x128xf32>
    %31 = tpu.matmul %29, %30, %cst_8 {dimension_numbers = #tpu.dot_dimension_numbers<[1], [0], [0], [1], [0, 0, 1, 1], [], []>} : vector<8x128xf32>, vector<128x128xf32>, vector<8x128xf32> -> vector<8x128xf32>
    %c0_9 = arith.constant 0 : index
    %c0_10 = arith.constant 0 : index
    %32 = vector.load %arg4[%c0_9, %c0_10] : memref<8x128xf32, #tpu.memory_space<vmem>>, vector<8x128xf32>
    tpu.vector_store %arg4[%c0_9, %c0_10], %31 {strides = array<i32>} : memref<8x128xf32, #tpu.memory_space<vmem>>, vector<8x128xf32>,
    return
  }
  func.func @transform_0(%arg0: i32) -> (i32, i32) {
    %c0_i32 = arith.constant 0 : i32
    %c0_i32_0 = arith.constant 0 : i32
    return %arg0, %c0_i32 : i32, i32
  }
  func.func @transform_1(%arg0: i32) -> (i32, i32) {
    %c0_i32 = arith.constant 0 : i32
    %c0_i32_0 = arith.constant 0 : i32
    %c0_i32_1 = arith.constant 0 : i32
    return %c0_i32, %c0_i32_0 : i32, i32
  }
  func.func @transform_2(%arg0: i32) -> (i32, i32) {
    %c0_i32 = arith.constant 0 : i32
    %c0_i32_0 = arith.constant 0 : i32
    %c0_i32_1 = arith.constant 0 : i32
    return %c0_i32, %c0_i32_0 : i32, i32
  }
  func.func @transform_3(%arg0: i32) -> (i32, i32) {
    %c0_i32 = arith.constant 0 : i32
    %c0_i32_0 = arith.constant 0 : i32
    return %arg0, %c0_i32 : i32, i32
  }
}

</mosaic_0001>

<llo_original>
// kernel: tpu_custom_call.1
$region0: #{tpu_custom_call.1}
  #allocation0 [shape = 'u32[]', space=smem, size = 0x4, offset = 0x4, fixed_abs, tag = 'smem constant byte address 0x4 - core index']
  #allocation1 [shape = 'u32[144,128]{1,0:T(1,128)}', space=vmem, size = 0x12000, scoped, tag = 'internal scratch']
  %s0 = inlined_call_operand.hbm [shape: bf16[3,8], index: 0, kind: input, shape index: {}]
  %s1 = inlined_call_operand.hbm [shape: bf16[8,128], index: 1, kind: input, shape index: {}]
  %s2 = inlined_call_operand.hbm [shape: f32[128,128], index: 2, kind: input, shape index: {}]
  %s3 = inlined_call_operand.hbm [shape: f32[3,128], index: 3, kind: output, shape index: {}]
  %s4 = sld [smem:[#allocation0]]
  $region34: #{tpu_custom_call.1} parent=0
    _
  %s6 = ssub.s32 1, %s4
  %s7 = scalar_select 0, %s6, %s4
  $region1: #{tpu_custom_call.1} parent=0
    #allocation2 [shape = 'u8[2048]{0}', space=vmem, size = 0x800, scoped, tag = 'input window, operand 0, single buffered']
    #allocation3 [shape = 's32[1]{0}', space=sflag, size = 0x4, scoped, tag = 'scoped memory for tpu_custom_call.1']
    #allocation4 [shape = 's32[1]{0}', space=sflag, size = 0x4, scoped, tag = 'scoped memory for tpu_custom_call.1']
    #allocation5 [shape = 'u8[2048]{0}', space=vmem, size = 0x800, scoped, tag = 'input window, operand 1, single buffered']
    #allocation6 [shape = 's32[1]{0}', space=sflag, size = 0x4, scoped, tag = 'scoped memory for tpu_custom_call.1']
    #allocation7 [shape = 'u8[65536]{0}', space=vmem, size = 0x10000, scoped, tag = 'input window, operand 2, single buffered']
    #allocation8 [shape = 'u8[4096]{0}', space=vmem, size = 0x1000, scoped, tag = 'output window, operand 0, single buffered']
    %8 = vsyncpa [#allocation3], 0
    %9 = vsyncpa [#allocation6], 0
    %10 = vsyncpa [#allocation4], 0
    // Predicated region
    $region2: #{tpu_custom_call.1} parent=1 // pred_check
      _
    $region3: #{tpu_custom_call.1} parent=1 // pred_check_branch
      %12 = sbr.rel (0) target = $region5
    $region4: #{tpu_custom_call.1} parent=1 // pred_region
      %s14 = ssub.s32 64, 32
      %15 = vsyncadd [#allocation3], %s14
      %s16 = sshll.u32 [#allocation2], 4
      %s17 = int_to_ptr.vmem [resolvable:$true] %s16
      %22 = dma.hbm_to_vmem [thread:$0]  %s0, 32, %s17, [#allocation3], 32, 32, 2
    $region5: #{tpu_custom_call.1} parent=1 // pred_fallthru
      _
    // Predicated region
    $region6: #{tpu_custom_call.1} parent=1 // pred_check
      _
    $region7: #{tpu_custom_call.1} parent=1 // pred_check_branch
      %24 = sbr.rel (0) target = $region9
    $region8: #{tpu_custom_call.1} parent=1 // pred_region
      %s26 = ssub.s32 64, 64
      %27 = vsyncadd [#allocation6], %s26
      %s29 = sshll.u32 [#allocation5], 4
      %s30 = int_to_ptr.vmem [resolvable:$true] %s29
      %32 = dma.hbm_to_vmem [thread:$0]  %s1, 64, %s30, [#allocation6]
    $region9: #{tpu_custom_call.1} parent=1 // pred_fallthru
      _
    // Predicated region
    $region10: #{tpu_custom_call.1} parent=1 // pred_check
      _
    $region11: #{tpu_custom_call.1} parent=1 // pred_check_branch
      %34 = sbr.rel (0) target = $region13
    $region12: #{tpu_custom_call.1} parent=1 // pred_region
      %s36 = ssub.s32 2048, 2048
      %37 = vsyncadd [#allocation6], %s36
      %s38 = sshll.u32 [#allocation7], 4
      %s39 = int_to_ptr.vmem [resolvable:$true] %s38
      %44 = dma.hbm_to_vmem [thread:$0]  %s2, 2048, %s39, [#allocation6], 128, 128, 8
    $region13: #{tpu_custom_call.1} parent=1 // pred_fallthru
      _
    // Predicated region
    $region14: #{tpu_custom_call.1} parent=1 // pred_check
      _
    $region15: #{tpu_custom_call.1} parent=1 // pred_check_branch
      %46 = sbr.rel (0) target = $region17
    $region16: #{tpu_custom_call.1} parent=1 // pred_region
      %47 = dma.done [#allocation3], 64
    $region17: #{tpu_custom_call.1} parent=1 // pred_fallthru
      _
    // Predicated region
    $region18: #{tpu_custom_call.1} parent=1 // pred_check
      _
    $region19: #{tpu_custom_call.1} parent=1 // pred_check_branch
      %49 = sbr.rel (0) target = $region21
    $region20: #{tpu_custom_call.1} parent=1 // pred_region
      %50 = dma.done [#allocation6], 64
    $region21: #{tpu_custom_call.1} parent=1 // pred_fallthru
      _
    // Predicated region
    $region22: #{tpu_custom_call.1} parent=1 // pred_check
      _
    $region23: #{tpu_custom_call.1} parent=1 // pred_check_branch
      %52 = sbr.rel (0) target = $region25
    $region24: #{tpu_custom_call.1} parent=1 // pred_region
      %53 = dma.done [#allocation6], 2048
    $region25: #{tpu_custom_call.1} parent=1 // pred_fallthru
      _
    %v55 = vld [vmem:[#allocation2] sm:$0x3]
    %v56 = vld [vmem:[#allocation2 + $0x2] sm:$0x3]
    %v57 = vld [vmem:[#allocation5] sm:$0xf]
    %v60 = vcombine.low %v55, %v56
    %v62 = vunpack.c.l.s4 1983009808
    %v63 = vunpack.c.0.s8 %v62
    %v64 = vlaneseq
    %v65 = vshrl.u32 %v64, 7
    %v66 = vsub.s32 %v63, %v65
    %v67 = vrot.slane %v60, %v66
    %vm68 = vcmask 64512
    %v70 = vsel %vm68, %v67, 0
    %vm72 = vcmask 1043456
    %v74 = vsel %vm72, %v57, 0
    %76 = vmatprep.subr.bf16.mxu0 0
    %77 = vmatpush1.bf16.msra.mxu0 0
    %78 = vmatprep.subr.bf16.mxu0 0
    %79 = vmatpush1.bf16.msra.mxu0 0
    %80 = vmatprep.subr.bf16.mxu0 0
    %81 = vmatpush1.bf16.msra.mxu0 0
    %82 = vmatprep.subr.bf16.mxu0 0
    %83 = vmatpush1.bf16.msra.mxu0 0
    %84 = vmatprep.subr.bf16.mxu0 0
    %85 = vmatpush1.bf16.msra.mxu0 0
    %86 = vmatprep.subr.bf16.mxu0 0
    %87 = vmatpush1.bf16.msra.mxu0 0
    %88 = vmatprep.subr.bf16.mxu0 0
    %89 = vmatpush1.bf16.msra.mxu0 0
    %90 = vmatprep.subr.bf16.mxu0 0
    %91 = vmatpush1.bf16.msra.mxu0 %v74
    %92 = vmatprep.subr.bf16.mxu0 0
    %93 = vmatpush2.bf16.msra.mxu0 0
    %94 = vmatprep.subr.bf16.mxu0 0
    %95 = vmatpush2.bf16.msra.mxu0 0
    %96 = vmatprep.subr.bf16.mxu0 0
    %97 = vmatpush2.bf16.msra.mxu0 0
    %98 = vmatprep.subr.bf16.mxu0 0
    %99 = vmatpush2.bf16.msra.mxu0 0
    %100 = vmatprep.subr.bf16.mxu0 0
    %101 = vmatpush2.bf16.msra.mxu0 0
    %102 = vmatprep.subr.bf16.mxu0 0
    %103 = vmatpush2.bf16.msra.mxu0 0
    %104 = vmatprep.subr.bf16.mxu0 0
    %105 = vmatpush2.bf16.msra.mxu0 0
    %106 = vmatprep.subr.bf16.mxu0 0
    %107 = vmatpush2.bf16.msra.mxu0 0
    %108 = vmatprep.mubr.bf16.mxu0 0
    %109 = vmatmul.mubr.bf16.gmra.mxu0 %v70
    %v110 = vpop.f32.mrf.mxu0
    %v111 = vadd.f32 0.0, %v110
    %v112 = vpop.f32.mrf.mxu0
    %v113 = vpop.f32.mrf.mxu0
    %v114 = vpop.f32.mrf.mxu0
    %115 = vdwg.mxu0
    %v116 = vlaneseq
    %v117 = vand.u32 %v116, 127
    %vm118 = vcmp.lt.s32.totalorder %v117, 0
    %v119 = vsub.s32 0, %v117
    %v120 = vsel %vm118, %v119, %v117
    %v121 = vshrl.u32 %v120, 5
    %v122 = vand.u32 %v120, 31
    %v123 = vsub.s32 0, %v122
    %v124 = vsel %vm118, %v123, %v122
    %vm125 = vcmp.ne.s32.totalorder %v124, 0
    %vm126 = vcmp.lt.s32.totalorder %v124, 0
    %vm127 = vmand %vm126, %vm125
    %v128 = vadd.s32 %v124, 32
    %v129 = vsel %vm127, %v128, %v124
    %v130 = vcvt.s32.f32 %v129
    %vm131 = vcmp.eq.f32.partialorder %v111, %v130
    %v132 = vsel %vm131, 1, 0
    %v133 = vcvt.s32.f32 %v132
    %vm134 = vcmp.eq.s32.totalorder %v129, 20
    %v135 = vsel %vm134, 1, 0
    %vm136 = vcmp.eq.s32.totalorder %v135, 1
    %v137 = vsel %vm136, %v111, %v133
    %v138 = vld [vmem:[#allocation7] sm:$0xff]
    %v139 = vld [vmem:[#allocation7 + $0x8] sm:$0xff]
    %v140 = vld [vmem:[#allocation7 + $0x10] sm:$0xff]
    %v141 = vld [vmem:[#allocation7 + $0x18] sm:$0xff]
    %v142 = vld [vmem:[#allocation7 + $0x20] sm:$0xff]
    %v143 = vld [vmem:[#allocation7 + $0x28] sm:$0xff]
    %v144 = vld [vmem:[#allocation7 + $0x30] sm:$0xff]
    %v145 = vld [vmem:[#allocation7 + $0x38] sm:$0xff]
    %v146 = vld [vmem:[#allocation7 + $0x40] sm:$0xff]
    %v147 = vld [vmem:[#allocation7 + $0x48] sm:$0xff]
    %v148 = vld [vmem:[#allocation7 + $0x50] sm:$0xff]
    %v149 = vld [vmem:[#allocation7 + $0x58] sm:$0xff]
    %v150 = vld [vmem:[#allocation7 + $0x60] sm:$0xff]
    %v151 = vld [vmem:[#allocation7 + $0x68] sm:$0xff]
    %v152 = vld [vmem:[#allocation7 + $0x70] sm:$0xff]
    %v153 = vld [vmem:[#allocation7 + $0x78] sm:$0xff]
    %154 = vmatprep.subr.mxu0 0.0
    %155 = vmatpush1.msra.mxu0 %v153
    %156 = vmatprep.subr.mxu0 0.0
    %157 = vmatpush1.msra.mxu0 %v152
    %158 = vmatprep.subr.mxu0 0.0
    %159 = vmatpush1.msra.mxu0 %v151
    %160 = vmatprep.subr.mxu0 0.0
    %161 = vmatpush1.msra.mxu0 %v150
    %162 = vmatprep.subr.mxu0 0.0
    %163 = vmatpush1.msra.mxu0 %v149
    %164 = vmatprep.subr.mxu0 0.0
    %165 = vmatpush1.msra.mxu0 %v148
    %166 = vmatprep.subr.mxu0 0.0
    %167 = vmatpush1.msra.mxu0 %v147
    %168 = vmatprep.subr.mxu0 0.0
    %169 = vmatpush1.msra.mxu0 %v146
    %170 = vmatprep.subr.mxu0 0.0
    %171 = vmatpush1.msra.mxu0 %v145
    %172 = vmatprep.subr.mxu0 0.0
    %173 = vmatpush1.msra.mxu0 %v144
    %174 = vmatprep.subr.mxu0 0.0
    %175 = vmatpush1.msra.mxu0 %v143
    %176 = vmatprep.subr.mxu0 0.0
    %177 = vmatpush1.msra.mxu0 %v142
    %178 = vmatprep.subr.mxu0 0.0
    %179 = vmatpush1.msra.mxu0 %v141
    %180 = vmatprep.subr.mxu0 0.0
    %181 = vmatpush1.msra.mxu0 %v140
    %182 = vmatprep.subr.mxu0 0.0
    %183 = vmatpush1.msra.mxu0 %v139
    %184 = vmatprep.subr.mxu0 0.0
    %185 = vmatpush1.msra.mxu0 %v138
    %186 = vmatprep.subr.mxu0 0.0
    %187 = vmatpush2.msra.mxu0 0.0
    %188 = vmatprep.subr.mxu0 0.0
    %189 = vmatpush2.msra.mxu0 0.0
    %190 = vmatprep.subr.mxu0 0.0
    %191 = vmatpush2.msra.mxu0 0.0
    %192 = vmatprep.subr.mxu0 0.0
    %193 = vmatpush2.msra.mxu0 0.0
    %194 = vmatprep.subr.mxu0 0.0
    %195 = vmatpush2.msra.mxu0 0.0
    %196 = vmatprep.subr.mxu0 0.0
    %197 = vmatpush2.msra.mxu0 0.0
    %198 = vmatprep.subr.mxu0 0.0
    %199 = vmatpush2.msra.mxu0 0.0
    %200 = vmatprep.subr.mxu0 0.0
    %201 = vmatpush2.msra.mxu0 0.0
    %202 = vmatprep.subr.mxu0 0.0
    %203 = vmatpush2.msra.mxu0 0.0
    %204 = vmatprep.subr.mxu0 0.0
    %205 = vmatpush2.msra.mxu0 0.0
    %206 = vmatprep.subr.mxu0 0.0
    %207 = vmatpush2.msra.mxu0 0.0
    %208 = vmatprep.subr.mxu0 0.0
    %209 = vmatpush2.msra.mxu0 0.0
    %210 = vmatprep.subr.mxu0 0.0
    %211 = vmatpush2.msra.mxu0 0.0
    %212 = vmatprep.subr.mxu0 0.0
    %213 = vmatpush2.msra.mxu0 0.0
    %214 = vmatprep.subr.mxu0 0.0
    %215 = vmatpush2.msra.mxu0 0.0
    %216 = vmatprep.subr.mxu0 0.0
    %217 = vmatpush2.msra.mxu0 0.0
    %218 = vmatprep.mubr.f32.mxu0 0.0
    %219 = vmatmul.mubr.f32.gmra.mxu0 %v137
    %v220 = vpop.f32.mrf.mxu0
    %v221 = vadd.f32 0.0, %v220
    %v222 = vpop.f32.mrf.mxu0
    %223 = vdwg.mxu0
    %224 = vst [vmem:[#allocation8] sm:$0xff] %v221
    // Predicated region
    $region26: #{tpu_custom_call.1} parent=1 // pred_check
      _
    $region27: #{tpu_custom_call.1} parent=1 // pred_check_branch
      %226 = sbr.rel (0) target = $region29
    $region28: #{tpu_custom_call.1} parent=1 // pred_region
      %s228 = ssub.s32 128, 64
      %229 = vsyncadd [#allocation4], %s228
      %s230 = sshll.u32 [#allocation8], 4
      %s231 = int_to_ptr.vmem [resolvable:$true] %s230
      %236 = dma.vmem_to_hbm [thread:$0]  %s231, 64, %s3, [#allocation4], 64, 64, 4
    $region29: #{tpu_custom_call.1} parent=1 // pred_fallthru
      _
    // Predicated region
    $region30: #{tpu_custom_call.1} parent=1 // pred_check
      _
    $region31: #{tpu_custom_call.1} parent=1 // pred_check_branch
      %238 = sbr.rel (0) target = $region33
    $region32: #{tpu_custom_call.1} parent=1 // pred_region
      %239 = dma.done [#allocation4], 128
    $region33: #{tpu_custom_call.1} parent=1 // pred_fallthru
      _
    %240 = vsyncpa [#allocation3], 1
    %241 = vsyncpa [#allocation6], 1
    %242 = vsyncpa [#allocation4], 1

</llo_original>
